<compile_context>
chip_gen: v7x
topology: tpu7x:2x2x1
jax: 0.10.0
libtpu: 0.0.40
codegen_flags: <defaults>
</compile_context>

<pallas_src>
import functools

import jax
import jax.numpy as jnp
from jax.experimental import pallas as pl
from jax.experimental.pallas import tpu as pltpu

HIDDEN = 64     # hidden width of both Linear layers (as in the torch module)
LANES = 128     # TPU lane width; fused head matmul is padded to this width


def _round_up(v, m):
    return ((v + m - 1) // m) * m


# ---------------------------------------------------------------------------
# Kernel
# ---------------------------------------------------------------------------
def dueling_dqn_kernel(x_ref, w1_ref, b1_ref, w2_ref, b2_ref, wh_ref, bh_ref,
                       out_ref, *, out_size, out_pad):
    """One batch tile of the full network.

    x_ref : (TB, in)  f32          w1/w2/wh : bf16        b1/b2/bh : f32
    wh/bh : fused head, columns [0:out_size]=advantage, [out_size]=value,
            remaining columns exactly zero.
    out_ref: (TB, out_pad) f32 -- Q in columns [0, out_size), junk elsewhere.
    """
    # input_layer + ReLU (cast x to bf16 in-kernel; f32 accumulate / bias / ReLU)
    x = x_ref[...].astype(jnp.bfloat16)
    h1 = jnp.dot(x, w1_ref[...], preferred_element_type=jnp.float32) + b1_ref[...]
    h1 = jnp.maximum(h1, 0.0)                                    # (TB, 64) f32

    # hidden_layer + ReLU
    h2 = jnp.dot(h1.astype(jnp.bfloat16), w2_ref[...],
                 preferred_element_type=jnp.float32) + b2_ref[...]
    h2 = jnp.maximum(h2, 0.0)                                    # (TB, 64) f32

    # fused advantage+value head (lane-dense 128-wide matmul, stays in VMEM)
    head = jnp.dot(h2.astype(jnp.bfloat16), wh_ref[...],
                   preferred_element_type=jnp.float32) + bh_ref[...]   # (TB, 128)

    val = head[:, out_size:out_size + 1]                         # (TB, 1)
    # padded columns are exactly zero -> sum(advantage) = sum(head) - value
    adv_sum = jnp.sum(head, axis=1, keepdims=True) - val
    adv_mean = adv_sum * jnp.float32(1.0 / out_size)             # constant multiply

    # Q = V + A - mean(A); only the narrow out_pad-wide slab is written to HBM.
    out_ref[...] = val + head[:, :out_pad] - adv_mean


# ---------------------------------------------------------------------------
# Wrapper
# ---------------------------------------------------------------------------
def prepare_params(params):
    """Hoisted per-call prep: fuse adv/value heads, lane-pad, cast weights to bf16."""
    w1, b1, w2, b2, wa, ba, wv, bv = params
    out_size = wa.shape[1]
    assert out_size + 1 <= LANES, "fused head assumes out_size + 1 <= 128"
    pad = LANES - (out_size + 1)
    wh = jnp.concatenate([wa, wv, jnp.zeros((HIDDEN, pad), jnp.float32)], axis=1)
    bh = jnp.concatenate([ba, bv, jnp.zeros((1, pad), jnp.float32)], axis=1)
    prepared = (w1.astype(jnp.bfloat16), b1,
                w2.astype(jnp.bfloat16), b2,
                wh.astype(jnp.bfloat16), bh)
    return prepared, out_size


def dueling_dqn_forward(x, w1, b1, w2, b2, wh, bh, *, out_size, batch_tile=4096):
    """Forward pass. x: (B, input_size) f32. Returns Q: (B, out_size) f32."""
    B, in_size = x.shape
    head_pad = wh.shape[1]                       # 128
    out_pad = _round_up(out_size, 8)             # narrow HBM output width

    # --- batch tiling -------------------------------------------------------
    # multiples of 16 (bf16 sublane pack); evenly-sized tiles so padding is tiny;
    # >=2 tiles for large batches so both v7x TensorCores get work.
    b16 = _round_up(B, 16)
    n_tiles = max(1, pl.cdiv(b16, batch_tile))
    if n_tiles == 1 and b16 >= 2048:
        n_tiles = 2
    tb = _round_up(pl.cdiv(b16, n_tiles), 16)
    grid_n = pl.cdiv(b16, tb)
    b_pad = grid_n * tb
    if b_pad != B:
        x = jnp.pad(x, ((0, b_pad - B), (0, 0)))

    const = lambda i: (0, 0)   # weights/biases: DMA once, stay VMEM-resident

    q_padded = pl.pallas_call(
        functools.partial(dueling_dqn_kernel, out_size=out_size, out_pad=out_pad),
        out_shape=jax.ShapeDtypeStruct((b_pad, out_pad), jnp.float32),
        grid=(grid_n,),
        in_specs=[
            pl.BlockSpec((tb, in_size), lambda i: (i, 0)),       # x: tiled over batch
            pl.BlockSpec((in_size, HIDDEN), const),              # w1 (bf16)
            pl.BlockSpec((1, HIDDEN), const),                    # b1 (f32)
            pl.BlockSpec((HIDDEN, HIDDEN), const),               # w2 (bf16)
            pl.BlockSpec((1, HIDDEN), const),                    # b2 (f32)
            pl.BlockSpec((HIDDEN, head_pad), const),             # fused head weight (bf16)
            pl.BlockSpec((1, head_pad), const),                  # fused head bias (f32)
        ],
        out_specs=pl.BlockSpec((tb, out_pad), lambda i: (i, 0)),
        compiler_params=pltpu.CompilerParams(
            dimension_semantics=("parallel",)),                  # megacore-shardable batch axis
    )(x, w1, b1, w2, b2, wh, bh)

    return q_padded[:B, :out_size]


# ---------------------------------------------------------------------------
# Init + references
# ---------------------------------------------------------------------------
def init_params(key, input_size, output_size, hidden=HIDDEN):
    """Deterministic torch.nn.Linear-style init: U(-1/sqrt(fan_in), 1/sqrt(fan_in))."""
    def linear(k, fan_in, fan_out):
        kw, kb = jax.random.split(k)
        bound = 1.0 / jnp.sqrt(jnp.float32(fan_in))
        w = jax.random.uniform(kw, (fan_in, fan_out), jnp.float32, -bound, bound)
        b = jax.random.uniform(kb, (1, fan_out), jnp.float32, -bound, bound)
        return w, b

    k1, k2, k3, k4 = jax.random.split(key, 4)
    w1, b1 = linear(k1, input_size, hidden)      # input_layer
    w2, b2 = linear(k2, hidden, hidden)          # hidden_layer
    wa, ba = linear(k3, hidden, output_size)     # advantage_layer
    wv, bv = linear(k4, hidden, 1)               # value_layer
    return (w1, b1, w2, b2, wa, ba, wv, bv)


def reference_forward_f32(x, params):
    """Pure f32 JAX reference (matches the torch module exactly)."""
    w1, b1, w2, b2, wa, ba, wv, bv = params
    h1 = jnp.maximum(x @ w1 + b1, 0.0)
    h2 = jnp.maximum(h1 @ w2 + b2, 0.0)
    adv = h2 @ wa + ba
    val = h2 @ wv + bv
    return val + adv - jnp.mean(adv, axis=1, keepdims=True)


def reference_forward_bf16(x, params):
    """JAX reference with the same bf16-operand / f32-accumulate precision as the kernel."""
    w1, b1, w2, b2, wa, ba, wv, bv = params
    bf = jnp.bfloat16
    dot = lambda a, b: jnp.dot(a.astype(bf), b.astype(bf),
                               preferred_element_type=jnp.float32)
    h1 = jnp.maximum(dot(x, w1) + b1, 0.0)
    h2 = jnp.maximum(dot(h1, w2) + b2, 0.0)
    adv = dot(h2, wa) + ba
    val = dot(h2, wv) + bv
    return val + adv - jnp.mean(adv, axis=1, keepdims=True)


# ---------------------------------------------------------------------------
# Main
# ---------------------------------------------------------------------------
if __name__ == "__main__":
    # LunarLander-like sizes: 8 state features, 4 actions, small batch.
    batch, input_size, output_size = 8, 8, 4

    key = jax.random.PRNGKey(0)
    kx, kp, kx2 = jax.random.split(key, 3)
    x = jax.random.normal(kx, (batch, input_size), dtype=jnp.float32)
    params = init_params(kp, input_size, output_size)

    prepared, out_size = prepare_params(params)
    fwd = jax.jit(dueling_dqn_forward, static_argnames=("out_size", "batch_tile"))

    # --- small batch (single tile) -------------------------------------------
    q = jax.block_until_ready(fwd(x, *prepared, out_size=out_size))
    assert q.shape == (batch, output_size)

    q_ref_bf16 = reference_forward_bf16(x, params)
    assert jnp.allclose(q, q_ref_bf16, atol=5e-4, rtol=5e-4), "mismatch vs bf16 JAX reference"

    q_ref_f32 = reference_forward_f32(x, params)
    assert jnp.allclose(q, q_ref_f32, atol=5e-2, rtol=5e-2), "mismatch vs f32 JAX reference"

    # --- larger, non-multiple batch (exercises multi-tile grid + pad slicing) --
    batch2 = 2500
    x2 = jax.random.normal(kx2, (batch2, input_size), dtype=jnp.float32)
    q2 = jax.block_until_ready(fwd(x2, *prepared, out_size=out_size, batch_tile=1024))
    assert q2.shape == (batch2, output_size)
    q2_ref = reference_forward_bf16(x2, params)
    assert jnp.allclose(q2, q2_ref, atol=5e-4, rtol=5e-4), "mismatch on large batch"

    print("KERNEL_OK")
</pallas_src>

<mosaic_0001>
module attributes {stable_mosaic.version = 11 : i64} {
  func.func @dueling_dqn_kernel(%arg0: i32, %arg1: memref<16x8xf32, #tpu.memory_space<vmem>>, %arg2: memref<8x64xbf16, #tpu.memory_space<vmem>>, %arg3: memref<1x64xf32, #tpu.memory_space<vmem>>, %arg4: memref<64x64xbf16, #tpu.memory_space<vmem>>, %arg5: memref<1x64xf32, #tpu.memory_space<vmem>>, %arg6: memref<64x128xbf16, #tpu.memory_space<vmem>>, %arg7: memref<1x128xf32, #tpu.memory_space<vmem>>, %arg8: memref<16x8xf32, #tpu.memory_space<vmem>>) attributes {dimension_semantics = [#tpu.dimension_semantics<parallel>], iteration_bounds = array<i64: 1>, scalar_prefetch = 0 : i64, scratch_operands = 0 : i64, tpu.core_type = #tpu.core_type<tc>, window_params = [{transform_indices = @transform_0, window_bounds = array<i64: 16, 8>}, {pipeline_mode = #tpu.pipeline_mode<synchronous>, transform_indices = @transform_1, window_bounds = array<i64: 8, 64>}, {pipeline_mode = #tpu.pipeline_mode<synchronous>, transform_indices = @transform_2, window_bounds = array<i64: 1, 64>}, {pipeline_mode = #tpu.pipeline_mode<synchronous>, transform_indices = @transform_3, window_bounds = array<i64: 64, 64>}, {pipeline_mode = #tpu.pipeline_mode<synchronous>, transform_indices = @transform_4, window_bounds = array<i64: 1, 64>}, {pipeline_mode = #tpu.pipeline_mode<synchronous>, transform_indices = @transform_5, window_bounds = array<i64: 64, 128>}, {pipeline_mode = #tpu.pipeline_mode<synchronous>, transform_indices = @transform_6, window_bounds = array<i64: 1, 128>}, {transform_indices = @transform_7, window_bounds = array<i64: 16, 8>}]} {
    %c0 = arith.constant 0 : index
    %c0_0 = arith.constant 0 : index
    %0 = vector.load %arg1[%c0, %c0_0] : memref<16x8xf32, #tpu.memory_space<vmem>>, vector<16x8xf32>
    %1 = arith.truncf %0 : vector<16x8xf32> to vector<16x8xbf16>
    %c0_1 = arith.constant 0 : index
    %c0_2 = arith.constant 0 : index
    %2 = vector.load %arg2[%c0_1, %c0_2] : memref<8x64xbf16, #tpu.memory_space<vmem>>, vector<8x64xbf16>
    %cst = arith.constant dense<0.000000e+00> : vector<16x64xf32>
    %3 = tpu.matmul %1, %2, %cst {dimension_numbers = #tpu.dot_dimension_numbers<[1], [0], [0], [1], [0, 0, 1, 1], [], []>} : vector<16x8xbf16>, vector<8x64xbf16>, vector<16x64xf32> -> vector<16x64xf32>
    %c0_3 = arith.constant 0 : index
    %c0_4 = arith.constant 0 : index
    %4 = vector.load %arg3[%c0_3, %c0_4] : memref<1x64xf32, #tpu.memory_space<vmem>>, vector<1x64xf32>
    %5 = vector.broadcast %4 : vector<1x64xf32> to vector<16x64xf32>
    %6 = arith.addf %3, %5 : vector<16x64xf32>
    %cst_5 = arith.constant 0.000000e+00 : f32
    %7 = vector.broadcast %cst_5 : f32 to vector<16x64xf32>
    %8 = arith.maximumf %6, %7 : vector<16x64xf32>
    %9 = arith.truncf %8 : vector<16x64xf32> to vector<16x64xbf16>
    %c0_6 = arith.constant 0 : index
    %c0_7 = arith.constant 0 : index
    %10 = vector.load %arg4[%c0_6, %c0_7] : memref<64x64xbf16, #tpu.memory_space<vmem>>, vector<64x64xbf16>
    %cst_8 = arith.constant dense<0.000000e+00> : vector<16x64xf32>
    %11 = tpu.matmul %9, %10, %cst_8 {dimension_numbers = #tpu.dot_dimension_numbers<[1], [0], [0], [1], [0, 0, 1, 1], [], []>} : vector<16x64xbf16>, vector<64x64xbf16>, vector<16x64xf32> -> vector<16x64xf32>
    %c0_9 = arith.constant 0 : index
    %c0_10 = arith.constant 0 : index
    %12 = vector.load %arg5[%c0_9, %c0_10] : memref<1x64xf32, #tpu.memory_space<vmem>>, vector<1x64xf32>
    %13 = vector.broadcast %12 : vector<1x64xf32> to vector<16x64xf32>
    %14 = arith.addf %11, %13 : vector<16x64xf32>
    %cst_11 = arith.constant 0.000000e+00 : f32
    %15 = vector.broadcast %cst_11 : f32 to vector<16x64xf32>
    %16 = arith.maximumf %14, %15 : vector<16x64xf32>
    %17 = arith.truncf %16 : vector<16x64xf32> to vector<16x64xbf16>
    %c0_12 = arith.constant 0 : index
    %c0_13 = arith.constant 0 : index
    %18 = vector.load %arg6[%c0_12, %c0_13] : memref<64x128xbf16, #tpu.memory_space<vmem>>, vector<64x128xbf16>
    %cst_14 = arith.constant dense<0.000000e+00> : vector<16x128xf32>
    %19 = tpu.matmul %17, %18, %cst_14 {dimension_numbers = #tpu.dot_dimension_numbers<[1], [0], [0], [1], [0, 0, 1, 1], [], []>} : vector<16x64xbf16>, vector<64x128xbf16>, vector<16x128xf32> -> vector<16x128xf32>
    %c0_15 = arith.constant 0 : index
    %c0_16 = arith.constant 0 : index
    %20 = vector.load %arg7[%c0_15, %c0_16] : memref<1x128xf32, #tpu.memory_space<vmem>>, vector<1x128xf32>
    %21 = vector.broadcast %20 : vector<1x128xf32> to vector<16x128xf32>
    %22 = arith.addf %19, %21 : vector<16x128xf32>
    %23 = vector.extract_strided_slice %22 {offsets = [0, 4], sizes = [16, 1], strides = [1, 1]} : vector<16x128xf32> to vector<16x1xf32>
    %cst_17 = arith.constant dense<0.000000e+00> : vector<16xf32>
    %24 = vector.multi_reduction <add>, %22, %cst_17 [1] : vector<16x128xf32> to vector<16xf32>
    %25 = vector.shape_cast %24 : vector<16xf32> to vector<16x1xf32>
    %26 = arith.subf %25, %23 : vector<16x1xf32>
    %cst_18 = arith.constant 2.500000e-01 : f32
    %27 = vector.broadcast %cst_18 : f32 to vector<16x1xf32>
    %28 = arith.mulf %26, %27 : vector<16x1xf32>
    %29 = vector.extract_strided_slice %22 {offsets = [0, 0], sizes = [16, 8], strides = [1, 1]} : vector<16x128xf32> to vector<16x8xf32>
    %30 = vector.broadcast %23 : vector<16x1xf32> to vector<16x8xf32>
    %31 = arith.addf %30, %29 : vector<16x8xf32>
    %32 = vector.broadcast %28 : vector<16x1xf32> to vector<16x8xf32>
    %33 = arith.subf %31, %32 : vector<16x8xf32>
    %c0_19 = arith.constant 0 : index
    %c0_20 = arith.constant 0 : index
    %34 = vector.load %arg8[%c0_19, %c0_20] : memref<16x8xf32, #tpu.memory_space<vmem>>, vector<16x8xf32>
    tpu.vector_store %arg8[%c0_19, %c0_20], %33 {strides = array<i32>} : memref<16x8xf32, #tpu.memory_space<vmem>>, vector<16x8xf32>,
    return
  }
  func.func @transform_0(%arg0: i32) -> (i32, i32) {
    %c0_i32 = arith.constant 0 : i32
    %c0_i32_0 = arith.constant 0 : i32
    return %arg0, %c0_i32 : i32, i32
  }
  func.func @transform_1(%arg0: i32) -> (i32, i32) {
    %c0_i32 = arith.constant 0 : i32
    %c0_i32_0 = arith.constant 0 : i32
    %c0_i32_1 = arith.constant 0 : i32
    return %c0_i32, %c0_i32_0 : i32, i32
  }
  func.func @transform_2(%arg0: i32) -> (i32, i32) {
    %c0_i32 = arith.constant 0 : i32
    %c0_i32_0 = arith.constant 0 : i32
    %c0_i32_1 = arith.constant 0 : i32
    return %c0_i32, %c0_i32_0 : i32, i32
  }
  func.func @transform_3(%arg0: i32) -> (i32, i32) {
    %c0_i32 = arith.constant 0 : i32
    %c0_i32_0 = arith.constant 0 : i32
    %c0_i32_1 = arith.constant 0 : i32
    return %c0_i32, %c0_i32_0 : i32, i32
  }
  func.func @transform_4(%arg0: i32) -> (i32, i32) {
    %c0_i32 = arith.constant 0 : i32
    %c0_i32_0 = arith.constant 0 : i32
    %c0_i32_1 = arith.constant 0 : i32
    return %c0_i32, %c0_i32_0 : i32, i32
  }
  func.func @transform_5(%arg0: i32) -> (i32, i32) {
    %c0_i32 = arith.constant 0 : i32
    %c0_i32_0 = arith.constant 0 : i32
    %c0_i32_1 = arith.constant 0 : i32
    return %c0_i32, %c0_i32_0 : i32, i32
  }
  func.func @transform_6(%arg0: i32) -> (i32, i32) {
    %c0_i32 = arith.constant 0 : i32
    %c0_i32_0 = arith.constant 0 : i32
    %c0_i32_1 = arith.constant 0 : i32
    return %c0_i32, %c0_i32_0 : i32, i32
  }
  func.func @transform_7(%arg0: i32) -> (i32, i32) {
    %c0_i32 = arith.constant 0 : i32
    %c0_i32_0 = arith.constant 0 : i32
    return %arg0, %c0_i32 : i32, i32
  }
}

</mosaic_0001>

<llo_original>
// kernel: dueling_dqn_forward.1
$region0: #{dueling_dqn_forward.1}
  #allocation0 [shape = 'u32[]', space=smem, size = 0x4, offset = 0x4, fixed_abs, tag = 'smem constant byte address 0x4 - core index']
  #allocation1 [shape = 'u32[144,128]{1,0:T(1,128)}', space=vmem, size = 0x12000, scoped, tag = 'internal scratch']
  %s0 = inlined_call_operand.vmem [shape: f32[16,8], index: 0, kind: input, shape index: {}]
  %s1 = inlined_call_operand.vmem [shape: bf16[8,64], index: 1, kind: input, shape index: {}]
  %s2 = inlined_call_operand.hbm [shape: f32[1,64], index: 2, kind: input, shape index: {}]
  %s3 = inlined_call_operand.vmem [shape: bf16[64,64], index: 3, kind: input, shape index: {}]
  %s4 = inlined_call_operand.vmem [shape: f32[1,64], index: 4, kind: input, shape index: {}]
  %s5 = inlined_call_operand.hbm [shape: bf16[64,128], index: 5, kind: input, shape index: {}]
  %s6 = inlined_call_operand.vmem [shape: f32[1,128], index: 6, kind: input, shape index: {}]
  %s7 = inlined_call_operand.vmem [shape: f32[16,8], index: 7, kind: output, shape index: {}]
  %s8 = sld [smem:[#allocation0]]
  $region46: #{dueling_dqn_forward.1} parent=0
    _
  %s10 = ssub.s32 1, %s8
  %s11 = scalar_select 0, %s10, %s8
  $region1: #{dueling_dqn_forward.1} parent=0
    #allocation2 [shape = 'u8[512]{0}', space=vmem, size = 0x400, scoped, tag = 'input window, operand 2, single buffered']
    #allocation3 [shape = 's32[1]{0}', space=sflag, size = 0x4, scoped, tag = 'scoped memory for dueling_dqn_forward.1']
    #allocation4 [shape = 'u8[16384]{0}', space=vmem, size = 0x4000, scoped, tag = 'input window, operand 5, single buffered']
    #allocation5 [shape = 's32[1]{0}', space=sflag, size = 0x4, scoped, tag = 'scoped memory for dueling_dqn_forward.1']
    %12 = vsyncpa [#allocation3], 0
    %13 = vsyncpa [#allocation5], 0
    // Predicated region
    $region2: #{dueling_dqn_forward.1} parent=1 // pred_check
      _
    $region3: #{dueling_dqn_forward.1} parent=1 // pred_check_branch
      %15 = sbr.rel (0) target = $region5
    $region4: #{dueling_dqn_forward.1} parent=1 // pred_region
      _
    $region5: #{dueling_dqn_forward.1} parent=1 // pred_fallthru
      _
    // Predicated region
    $region6: #{dueling_dqn_forward.1} parent=1 // pred_check
      _
    $region7: #{dueling_dqn_forward.1} parent=1 // pred_check_branch
      %17 = sbr.rel (0) target = $region9
    $region8: #{dueling_dqn_forward.1} parent=1 // pred_region
      _
    $region9: #{dueling_dqn_forward.1} parent=1 // pred_fallthru
      _
    // Predicated region
    $region10: #{dueling_dqn_forward.1} parent=1 // pred_check
      _
    $region11: #{dueling_dqn_forward.1} parent=1 // pred_check_branch
      %19 = sbr.rel (0) target = $region13
    $region12: #{dueling_dqn_forward.1} parent=1 // pred_region
      %s21 = ssub.s32 16, 16
      %22 = vsyncadd [#allocation3], %s21
      %s24 = sshll.u32 [#allocation2], 4
      %s25 = int_to_ptr.vmem [resolvable:$true] %s24
      %27 = dma.hbm_to_vmem [thread:$0]  %s2, 16, %s25, [#allocation3]
    $region13: #{dueling_dqn_forward.1} parent=1 // pred_fallthru
      _
    // Predicated region
    $region14: #{dueling_dqn_forward.1} parent=1 // pred_check
      _
    $region15: #{dueling_dqn_forward.1} parent=1 // pred_check_branch
      %29 = sbr.rel (0) target = $region17
    $region16: #{dueling_dqn_forward.1} parent=1 // pred_region
      _
    $region17: #{dueling_dqn_forward.1} parent=1 // pred_fallthru
      _
    // Predicated region
    $region18: #{dueling_dqn_forward.1} parent=1 // pred_check
      _
    $region19: #{dueling_dqn_forward.1} parent=1 // pred_check_branch
      %31 = sbr.rel (0) target = $region21
    $region20: #{dueling_dqn_forward.1} parent=1 // pred_region
      _
    $region21: #{dueling_dqn_forward.1} parent=1 // pred_fallthru
      _
    // Predicated region
    $region22: #{dueling_dqn_forward.1} parent=1 // pred_check
      _
    $region23: #{dueling_dqn_forward.1} parent=1 // pred_check_branch
      %33 = sbr.rel (0) target = $region25
    $region24: #{dueling_dqn_forward.1} parent=1 // pred_region
      %s35 = ssub.s32 512, 512
      %36 = vsyncadd [#allocation5], %s35
      %s37 = sshll.u32 [#allocation4], 4
      %s38 = int_to_ptr.vmem [resolvable:$true] %s37
      %43 = dma.hbm_to_vmem [thread:$0]  %s5, 512, %s38, [#allocation5], 64, 64, 4
    $region25: #{dueling_dqn_forward.1} parent=1 // pred_fallthru
      _
    // Predicated region
    $region26: #{dueling_dqn_forward.1} parent=1 // pred_check
      _
    $region27: #{dueling_dqn_forward.1} parent=1 // pred_check_branch
      %45 = sbr.rel (0) target = $region29
    $region28: #{dueling_dqn_forward.1} parent=1 // pred_region
      _
    $region29: #{dueling_dqn_forward.1} parent=1 // pred_fallthru
      _
    // Predicated region
    $region30: #{dueling_dqn_forward.1} parent=1 // pred_check
      _
    $region31: #{dueling_dqn_forward.1} parent=1 // pred_check_branch
      %47 = sbr.rel (0) target = $region33
    $region32: #{dueling_dqn_forward.1} parent=1 // pred_region
      %48 = dma.done [#allocation3], 16
    $region33: #{dueling_dqn_forward.1} parent=1 // pred_fallthru
      _
    // Predicated region
    $region34: #{dueling_dqn_forward.1} parent=1 // pred_check
      _
    $region35: #{dueling_dqn_forward.1} parent=1 // pred_check_branch
      %50 = sbr.rel (0) target = $region37
    $region36: #{dueling_dqn_forward.1} parent=1 // pred_region
      %51 = dma.done [#allocation5], 512
    $region37: #{dueling_dqn_forward.1} parent=1 // pred_fallthru
      _
    %v53 = vld [vmem:[%s0] sm:$0xff]
    %v54 = vld [vmem:[%s0 + $0x8] sm:$0xff]
    %v55 = vpack.c.bf16 %v54, %v53
    %v56 = vld [vmem:[%s1] sm:$0xf]
    %v57 = vld [vmem:[#allocation2] sm:$0x1]
    %v59 = vlaneseq
    %v60 = vshrl.u32 %v59, 7
    %v61 = vsub.s32 0, %v60
    %v62 = vrot.slane %v57, %v61
    %vm64 = vcmask 64512
    %v66 = vsel %vm64, %v55, 0
    %vm68 = vcmask 1043456
    %v70 = vsel %vm68, %v56, 0
    %72 = vmatprep.subr.bf16.mxu0 0
    %73 = vmatpush1.bf16.msra.mxu0 %v70
    %74 = vmatprep.subr.bf16.mxu0 0
    %75 = vmatpush1.bf16.msra.mxu0 0
    %76 = vmatprep.subr.bf16.mxu0 0
    %77 = vmatpush1.bf16.msra.mxu0 0
    %78 = vmatprep.subr.bf16.mxu0 0
    %79 = vmatpush1.bf16.msra.mxu0 0
    %80 = vmatprep.subr.bf16.mxu0 0
    %81 = vmatpush1.bf16.msra.mxu0 0
    %82 = vmatprep.subr.bf16.mxu0 0
    %83 = vmatpush1.bf16.msra.mxu0 0
    %84 = vmatprep.subr.bf16.mxu0 0
    %85 = vmatpush1.bf16.msra.mxu0 0
    %86 = vmatprep.subr.bf16.mxu0 0
    %87 = vmatpush1.bf16.msra.mxu0 0
    %88 = vmatprep.subr.bf16.mxu0 0
    %89 = vmatpush1.bf16.msra.mxu0 0
    %90 = vmatprep.subr.bf16.mxu0 0
    %91 = vmatpush1.bf16.msra.mxu0 0
    %92 = vmatprep.subr.bf16.mxu0 0
    %93 = vmatpush1.bf16.msra.mxu0 0
    %94 = vmatprep.subr.bf16.mxu0 0
    %95 = vmatpush1.bf16.msra.mxu0 0
    %96 = vmatprep.subr.bf16.mxu0 0
    %97 = vmatpush1.bf16.msra.mxu0 0
    %98 = vmatprep.subr.bf16.mxu0 0
    %99 = vmatpush1.bf16.msra.mxu0 0
    %100 = vmatprep.subr.bf16.mxu0 0
    %101 = vmatpush1.bf16.msra.mxu0 0
    %102 = vmatprep.subr.bf16.mxu0 0
    %103 = vmatpush1.bf16.msra.mxu0 0
    %104 = vmatprep.mubr.bf16.mxu0 0
    %105 = vmatmul.mubr.bf16.gmra.mrb[0].mxu0 %v66
    %v106 = vpop.f32.mrb[0].mxu0
    %v107 = vadd.f32 %v62, %v106
    %v108 = vpop.f32.mrb[0].mxu0
    %v109 = vpop.f32.mrb[0].mxu0
    %v110 = vadd.f32 %v62, %v109
    %v111 = vpop.f32.mrb[0].mxu0
    %112 = vdwg.mxu0
    %v113 = vmax.f32 %v107, 0.0
    %v114 = vmax.f32 %v110, 0.0
    %v115 = vpack.c.bf16 %v114, %v113
    %v116 = vld [vmem:[%s3] sm:$0xf]
    %v117 = vld [vmem:[%s3 + $0x4] sm:$0xf]
    %v118 = vld [vmem:[%s3 + $0x8] sm:$0xf]
    %v119 = vld [vmem:[%s3 + $0xc] sm:$0xf]
    %v120 = vld [vmem:[%s3 + $0x10] sm:$0xf]
    %v121 = vld [vmem:[%s3 + $0x14] sm:$0xf]
    %v122 = vld [vmem:[%s3 + $0x18] sm:$0xf]
    %v123 = vld [vmem:[%s3 + $0x1c] sm:$0xf]
    %v124 = vld [vmem:[%s4] sm:$0x1]
    %v126 = vlaneseq
    %v127 = vshrl.u32 %v126, 7
    %v128 = vsub.s32 0, %v127
    %v129 = vrot.slane %v124, %v128
    %v139 = vunpack.c.l.b16 %v116
    %v140 = vunpack.c.l.b16 %v117
    %v141 = vunpack.c.l.b16 %v118
    %v142 = vunpack.c.l.b16 %v119
    %v143 = vunpack.c.l.b16 %v120
    %v144 = vunpack.c.l.b16 %v121
    %v145 = vunpack.c.l.b16 %v122
    %v146 = vunpack.c.l.b16 %v123
    %v147 = vpack.c.b16 %v140, %v139
    %v148 = vpack.c.b16 %v142, %v141
    %v149 = vpack.c.b16 %v144, %v143
    %v150 = vpack.c.b16 %v146, %v145
    %vm155 = vcmask 523264
    %v157 = vsel %vm155, %v115, 0
    %159 = vmatprep.subr.bf16.mxu0 0
    %160 = vmatpush1.bf16.msra.mxu0 %v147
    %161 = vmatprep.subr.bf16.mxu0 0
    %162 = vmatpush1.bf16.msra.mxu0 %v148
    %163 = vmatprep.subr.bf16.mxu0 0
    %164 = vmatpush1.bf16.msra.mxu0 %v149
    %165 = vmatprep.subr.bf16.mxu0 0
    %166 = vmatpush1.bf16.msra.mxu0 %v150
    %167 = vmatprep.subr.bf16.mxu0 0
    %168 = vmatpush1.bf16.msra.mxu0 0
    %169 = vmatprep.subr.bf16.mxu0 0
    %170 = vmatpush1.bf16.msra.mxu0 0
    %171 = vmatprep.subr.bf16.mxu0 0
    %172 = vmatpush1.bf16.msra.mxu0 0
    %173 = vmatprep.subr.bf16.mxu0 0
    %174 = vmatpush1.bf16.msra.mxu0 0
    %175 = vmatprep.subr.bf16.mxu0 0
    %176 = vmatpush1.bf16.msra.mxu0 0
    %177 = vmatprep.subr.bf16.mxu0 0
    %178 = vmatpush1.bf16.msra.mxu0 0
    %179 = vmatprep.subr.bf16.mxu0 0
    %180 = vmatpush1.bf16.msra.mxu0 0
    %181 = vmatprep.subr.bf16.mxu0 0
    %182 = vmatpush1.bf16.msra.mxu0 0
    %183 = vmatprep.subr.bf16.mxu0 0
    %184 = vmatpush1.bf16.msra.mxu0 0
    %185 = vmatprep.subr.bf16.mxu0 0
    %186 = vmatpush1.bf16.msra.mxu0 0
    %187 = vmatprep.subr.bf16.mxu0 0
    %188 = vmatpush1.bf16.msra.mxu0 0
    %189 = vmatprep.subr.bf16.mxu0 0
    %190 = vmatpush1.bf16.msra.mxu0 0
    %191 = vmatprep.mubr.bf16.mxu0 0
    %192 = vmatmul.mubr.bf16.gmra.mrb[0].mxu0 %v157
    %v193 = vpop.f32.mrb[0].mxu0
    %v194 = vadd.f32 %v129, %v193
    %v195 = vpop.f32.mrb[0].mxu0
    %v196 = vpop.f32.mrb[0].mxu0
    %v197 = vadd.f32 %v129, %v196
    %v198 = vpop.f32.mrb[0].mxu0
    %199 = vdwg.mxu0
    %v200 = vmax.f32 %v194, 0.0
    %v201 = vmax.f32 %v197, 0.0
    %v202 = vpack.c.bf16 %v201, %v200
    %v203 = vld [vmem:[#allocation4] sm:$0xf]
    %v204 = vld [vmem:[#allocation4 + $0x4] sm:$0xf]
    %v205 = vld [vmem:[#allocation4 + $0x8] sm:$0xf]
    %v206 = vld [vmem:[#allocation4 + $0xc] sm:$0xf]
    %v207 = vld [vmem:[#allocation4 + $0x10] sm:$0xf]
    %v208 = vld [vmem:[#allocation4 + $0x14] sm:$0xf]
    %v209 = vld [vmem:[#allocation4 + $0x18] sm:$0xf]
    %v210 = vld [vmem:[#allocation4 + $0x1c] sm:$0xf]
    %v211 = vld [vmem:[%s6] sm:$0x1]
    %v213 = vlaneseq
    %v214 = vshrl.u32 %v213, 7
    %v215 = vsub.s32 0, %v214
    %v216 = vrot.slane %v211, %v215
    %v226 = vunpack.c.l.b16 %v203
    %v227 = vunpack.c.l.b16 %v204
    %v228 = vunpack.c.l.b16 %v205
    %v229 = vunpack.c.l.b16 %v206
    %v230 = vunpack.c.l.b16 %v207
    %v231 = vunpack.c.l.b16 %v208
    %v232 = vunpack.c.l.b16 %v209
    %v233 = vunpack.c.l.b16 %v210
    %v234 = vpack.c.b16 %v227, %v226
    %v235 = vpack.c.b16 %v229, %v228
    %v236 = vpack.c.b16 %v231, %v230
    %v237 = vpack.c.b16 %v233, %v232
    %v243 = vsel %vm155, %v202, 0
    %245 = vmatprep.subr.bf16.mxu0 0
    %246 = vmatpush1.bf16.msra.mxu0 %v234
    %247 = vmatprep.subr.bf16.mxu0 0
    %248 = vmatpush1.bf16.msra.mxu0 %v235
    %249 = vmatprep.subr.bf16.mxu0 0
    %250 = vmatpush1.bf16.msra.mxu0 %v236
    %251 = vmatprep.subr.bf16.mxu0 0
    %252 = vmatpush1.bf16.msra.mxu0 %v237
    %253 = vmatprep.subr.bf16.mxu0 0
    %254 = vmatpush1.bf16.msra.mxu0 0
    %255 = vmatprep.subr.bf16.mxu0 0
    %256 = vmatpush1.bf16.msra.mxu0 0
    %257 = vmatprep.subr.bf16.mxu0 0
    %258 = vmatpush1.bf16.msra.mxu0 0
    %259 = vmatprep.subr.bf16.mxu0 0
    %260 = vmatpush1.bf16.msra.mxu0 0
    %261 = vmatprep.subr.bf16.mxu0 0
    %262 = vmatpush1.bf16.msra.mxu0 0
    %263 = vmatprep.subr.bf16.mxu0 0
    %264 = vmatpush1.bf16.msra.mxu0 0
    %265 = vmatprep.subr.bf16.mxu0 0
    %266 = vmatpush1.bf16.msra.mxu0 0
    %267 = vmatprep.subr.bf16.mxu0 0
    %268 = vmatpush1.bf16.msra.mxu0 0
    %269 = vmatprep.subr.bf16.mxu0 0
    %270 = vmatpush1.bf16.msra.mxu0 0
    %271 = vmatprep.subr.bf16.mxu0 0
    %272 = vmatpush1.bf16.msra.mxu0 0
    %273 = vmatprep.subr.bf16.mxu0 0
    %274 = vmatpush1.bf16.msra.mxu0 0
    %275 = vmatprep.subr.bf16.mxu0 0
    %276 = vmatpush1.bf16.msra.mxu0 0
    %277 = vmatprep.mubr.bf16.mxu0 0
    %278 = vmatmul.mubr.bf16.gmra.mrb[0].mxu0 %v243
    %v279 = vpop.f32.mrb[0].mxu0
    %v280 = vadd.f32 %v216, %v279
    %v281 = vpop.f32.mrb[0].mxu0
    %v282 = vpop.f32.mrb[0].mxu0
    %v283 = vadd.f32 %v216, %v282
    %v284 = vpop.f32.mrb[0].mxu0
    %285 = vdwg.mxu0
    %286 = vadd.xlane.f32.xlu0 %v280
    %v287 = vpop.xlane.xlu0 %286
    %288 = vadd.xlane.f32.xlu0 %v283
    %v289 = vpop.xlane.xlu0 %288
    %v290 = vsub.f32 %v287, %v280
    %v291 = vsub.f32 %v289, %v283
    %v292 = vmul.f32 %v290, 0.25
    %v293 = vmul.f32 %v291, 0.25
    %295 = vset.pattern.permute.xlu0 4
    %296 = vperm.xlu0 %295, %v280
    %v297 = vpop.permute.xlu0 %296
    %300 = vset.pattern.permute.xlu0 4
    %301 = vperm.xlu0 %300, %v283
    %v302 = vpop.permute.xlu0 %301
    %v304 = vadd.f32 %v297, %v280
    %v305 = vadd.f32 %v302, %v283
    %307 = vset.pattern.permute.xlu0 4
    %308 = vperm.xlu0 %307, %v292
    %v309 = vpop.permute.xlu0 %308
    %312 = vset.pattern.permute.xlu0 4
    %313 = vperm.xlu0 %312, %v293
    %v314 = vpop.permute.xlu0 %313
    %v316 = vsub.f32 %v304, %v309
    %v317 = vsub.f32 %v305, %v314
    %318 = vst.msk [vmem:[%s7] sm:$0xff] %vm64, %v316
    %319 = vst.msk [vmem:[%s7 + $0x8] sm:$0xff] %vm64, %v317
    // Predicated region
    $region38: #{dueling_dqn_forward.1} parent=1 // pred_check
      _
    $region39: #{dueling_dqn_forward.1} parent=1 // pred_check_branch
      %321 = sbr.rel (0) target = $region41
    $region40: #{dueling_dqn_forward.1} parent=1 // pred_region
      _
    $region41: #{dueling_dqn_forward.1} parent=1 // pred_fallthru
      _
    // Predicated region
    $region42: #{dueling_dqn_forward.1} parent=1 // pred_check
      _
    $region43: #{dueling_dqn_forward.1} parent=1 // pred_check_branch
      %323 = sbr.rel (0) target = $region45
    $region44: #{dueling_dqn_forward.1} parent=1 // pred_region
      _
    $region45: #{dueling_dqn_forward.1} parent=1 // pred_fallthru
      _
    %324 = vsyncpa [#allocation3], 1
    %325 = vsyncpa [#allocation5], 1

</llo_original>
